<compile_context>
chip_gen: v7x
topology: tpu7x:2x2x1
jax: 0.10.0
libtpu: 0.0.40
codegen_flags: <defaults>
</compile_context>

<pallas_src>
import functools

import jax
import jax.numpy as jnp
from jax.experimental import pallas as pl
from jax.experimental.pallas import tpu as pltpu

NEG_SLOPE = 0.01  # torch.nn.LeakyReLU() default negative_slope


def _cdiv(a, b):
    return -(-a // b)


def _round_up(x, m):
    return _cdiv(x, m) * m


def _vmem_capacity_bytes():
    try:
        return int(pltpu.get_tpu_info().vmem_capacity_bytes)
    except Exception:
        return 64 * 1024 * 1024  # conservative: assume v7x-sized VMEM


# Kernel operands:
#   slab : (MPp, Bp)  f32/bf16 -- per-path pre-activation sum_steps(...), pairs on lanes
#   b    : (1,)       f32      -- bias scalar in SMEM
#   out  : (1, Bp)    f32      -- sigmoid scores, lane-dense
#   acc  : (1, TB)    f32      -- VMEM accumulator across MP tiles
def _pathl_kernel(slab_ref, b_ref, out_ref, acc_ref):
    mp_i = pl.program_id(1)

    @pl.when(mp_i == 0)
    def _():
        acc_ref[...] = jnp.zeros_like(acc_ref)

    x = slab_ref[...].astype(jnp.float32)                      # (TMP, TB) per-path scores
    leaky = jnp.where(x >= 0.0, x, NEG_SLOPE * x)              # LeakyReLU per path
    acc_ref[...] += jnp.sum(leaky, axis=0, keepdims=True)      # sum over paths -> (1, TB)

    @pl.when(mp_i == pl.num_programs(1) - 1)
    def _():
        out_ref[...] = jax.nn.sigmoid(acc_ref[...] + b_ref[0])


def pathl_pallas_call(slab, b, tmp_tile, tb_tile, vmem_limit_bytes):
    MPp, Bp = slab.shape
    nb = Bp // tb_tile
    nmp = MPp // tmp_tile
    return pl.pallas_call(
        _pathl_kernel,
        out_shape=jax.ShapeDtypeStruct((1, Bp), jnp.float32),
        grid=(nb, nmp),
        in_specs=[
            pl.BlockSpec((tmp_tile, tb_tile), lambda bi, mi: (mi, bi)),
            pl.BlockSpec(memory_space=pltpu.MemorySpace.SMEM),
        ],
        out_specs=pl.BlockSpec((1, tb_tile), lambda bi, mi: (0, bi)),
        scratch_shapes=[pltpu.VMEM((1, tb_tile), jnp.float32)],
        compiler_params=pltpu.CompilerParams(
            dimension_semantics=("parallel", "arbitrary"),
            vmem_limit_bytes=vmem_limit_bytes,
        ),
    )(slab, b)


def _choose_tiles(MP, B, itemsize, target_block_bytes):
    """Pick (tmp_tile, tb_tile, MPp, Bp) minimizing padding and bounding block bytes."""
    sub = 8 if itemsize >= 4 else 16          # sublane granularity: f32 -> 8, bf16 -> 16

    # Pair (lane) axis: choose tile count first so padding stays < 128 lanes; cap at 1024.
    b128 = _round_up(B, 128)
    nb = _cdiv(b128, 1024)
    tb_tile = _round_up(_cdiv(B, nb), 128)
    Bp = _round_up(B, tb_tile)
    nb = Bp // tb_tile
    # v7x has 2 TensorCores: give the "parallel" B axis >=2 tiles when it can stay /128.
    if nb == 1 and tb_tile % 256 == 0:
        tb_tile //= 2
        nb = 2

    # Path (sublane) axis: choose tile count first so padding stays < `sub` rows, and the
    # (double-buffered) input block stays within target_block_bytes.
    rows_budget = max(sub, target_block_bytes // (tb_tile * itemsize))
    nmp = max(1, _cdiv(MP, rows_budget))
    tmp_tile = _round_up(_cdiv(MP, nmp), sub)
    MPp = _round_up(MP, tmp_tile)
    return tmp_tile, tb_tile, MPp, Bp


def pathl_forward(all_steps, B, MP, S, Vf, Vc, W1, W2, b,
                  *, slab_dtype=jnp.float32, target_block_bytes=None):
    """Glue equivalent to the indexing in PathL.forward: gathers + layout for the kernel."""
    NV, F = Vf.shape

    # Precombined per-node/edge scalar contribution (tiny NVxF elementwise + reduce):
    #   node_contrib[i] = sum_f Vf[i,f]*W1[Vc[i],f] + W2[Vc[i],0]
    # The padding row (index NV-1, selected by step index -1) contributes exactly 0,
    # reproducing the reference's Vf zeroing + W2_mask.
    node_contrib = jnp.sum(Vf * W1[Vc], axis=1) + W2[Vc, 0]
    node_contrib = node_contrib.at[NV - 1].set(0.0)

    # -1 padding step indices select the last (padding) row, as in torch.
    idx = jnp.where(all_steps < 0, NV - 1, all_steps).reshape(B, MP, S)
    # Per-path pre-activation: 1-D gather + sum over steps, hoisted out of the kernel.
    path_val = jnp.take(node_contrib, idx, axis=0).sum(axis=2)          # (B, MP) f32
    slab = path_val.T                                                   # (MP, B)

    itemsize = jnp.dtype(slab_dtype).itemsize
    vmem_cap = _vmem_capacity_bytes()
    big_vmem = vmem_cap >= 128 * 1024 * 1024                            # v5e / v6e
    if target_block_bytes is None:
        target_block_bytes = (16 if big_vmem else 8) * 1024 * 1024
    vmem_limit = (64 if big_vmem else 48) * 1024 * 1024

    tmp_tile, tb_tile, MPp, Bp = _choose_tiles(MP, B, itemsize, target_block_bytes)
    # Zero padding is semantically inert: padded paths contribute LeakyReLU(0) = 0; padded
    # pair lanes are sliced off below.
    slab = jnp.pad(slab, ((0, MPp - MP), (0, Bp - B))).astype(slab_dtype)

    out = pathl_pallas_call(slab, jnp.reshape(b, (1,)).astype(jnp.float32),
                            tmp_tile, tb_tile, vmem_limit)
    return out[0, :B]


def pathl_reference(all_steps, B, MP, S, Vf, Vc, W1, W2, b):
    """Pure-JAX transcription of PathL.forward for verification."""
    NV, F = Vf.shape
    steps = all_steps.reshape(-1)
    idx = jnp.where(steps < 0, steps + NV, steps)
    Vc_slc = Vc[idx]
    Vf_slc = Vf[idx].reshape(B * MP, S, F)
    Vf_slc = jnp.where((steps.reshape(B * MP, S) == -1)[..., None], 0.0, Vf_slc)
    W1_slc = W1[Vc_slc].reshape(B * MP, S, F)
    W2_slc = W2[Vc_slc].reshape(B * MP, S)
    W2_mask = jnp.where(steps == -1, 0.0, 1.0).reshape(B * MP, S)
    feat_prod = Vf_slc * W1_slc
    pre = (W2_slc * W2_mask + feat_prod.sum(2)).sum(1)
    leaky = jnp.where(pre >= 0.0, pre, NEG_SLOPE * pre)
    return jax.nn.sigmoid(leaky.reshape(B, MP).sum(1) + b)


def _make_inputs(key, n, m, rho, ell, F, S, B, MP):
    """Synthetic graph-sized tensors (no networkx / file IO): the forward only needs
    Vf, Vc, W1, W2, b and the path-step index array produced by get_batch_paths."""
    k1, k2, k3, k4, k5, k6, k7 = jax.random.split(key, 7)
    NV = n + m + 1
    Vf = jax.random.normal(k1, (NV, F), dtype=jnp.float32)
    Vf = Vf.at[n + m].set(0.0)                                           # padding row
    Vc = jax.random.randint(k2, (n + m,), 0, rho + ell)
    Vc = jnp.concatenate([Vc, jnp.array([rho + ell])]).astype(jnp.int32)  # padding type
    W1 = 0.1 * jax.random.normal(k3, (rho + ell + 1, F), dtype=jnp.float32)
    W2 = 0.1 * jax.random.normal(k4, (rho + ell + 1, 1), dtype=jnp.float32)
    b = 0.1 * jax.random.normal(k5, (), dtype=jnp.float32)
    # all_steps: flat path-step indices into Vf/Vc, -1 marks padding (as in get_batch_paths)
    steps = jax.random.randint(k6, (B * MP * S,), 0, n + m)
    drop = jax.random.bernoulli(k7, 0.3, (B * MP * S,))
    all_steps = jnp.where(drop, -1, steps).astype(jnp.int32)
    return all_steps, Vf, Vc, W1, W2, b


if __name__ == "__main__":
    key = jax.random.PRNGKey(0)
    fwd = jax.jit(pathl_forward, static_argnums=(1, 2, 3),
                  static_argnames=("slab_dtype", "target_block_bytes"))

    # --- Test 1: small shapes, f32 slab, single-tile grid ---------------------------------
    n, m, rho, ell, F, S, B, MP = 10, 6, 2, 2, 4, 5, 2, 3
    all_steps, Vf, Vc, W1, W2, b = _make_inputs(key, n, m, rho, ell, F, S, B, MP)
    out = jax.block_until_ready(fwd(all_steps, B, MP, S, Vf, Vc, W1, W2, b))
    ref = pathl_reference(all_steps, B, MP, S, Vf, Vc, W1, W2, b)
    assert out.shape == (B,)
    assert jnp.allclose(out, ref, atol=1e-5, rtol=1e-5), (out, ref)

    # --- Test 2: bf16 slab option (halved HBM traffic); tolerance sized for quantization --
    out_bf16 = jax.block_until_ready(
        fwd(all_steps, B, MP, S, Vf, Vc, W1, W2, b, slab_dtype=jnp.bfloat16))
    assert jnp.allclose(out_bf16, ref, atol=1e-2, rtol=1e-2), (out_bf16, ref)

    # --- Test 3: multi-tile grid (forces >1 tile on both the B and MP axes) ---------------
    n2, m2, rho2, ell2, F2, S2, B2, MP2 = 40, 25, 3, 2, 6, 7, 512, 40
    all_steps2, Vf2, Vc2, W12, W22, b2 = _make_inputs(
        jax.random.PRNGKey(1), n2, m2, rho2, ell2, F2, S2, B2, MP2)
    out2 = jax.block_until_ready(
        fwd(all_steps2, B2, MP2, S2, Vf2, Vc2, W12, W22, b2,
            target_block_bytes=4096))  # tiny block target -> grid (2, 5), exercises accumulator
    ref2 = pathl_reference(all_steps2, B2, MP2, S2, Vf2, Vc2, W12, W22, b2)
    assert out2.shape == (B2,)
    assert jnp.allclose(out2, ref2, atol=1e-5, rtol=1e-5)

    # TODO(synk): the `pd.DataFrame(Vf_slc).to_csv('vf')` debug side-effect and the optional
    # feat_transform_func hook in the torch forward are intentionally omitted (file IO /
    # arbitrary host callback), as is the networkx/get_batch_paths host-side index building.
    print("KERNEL_OK")
</pallas_src>

<mosaic_0001>
module attributes {stable_mosaic.version = 11 : i64} {
  func.func @_pathl_kernel(%arg0: i32, %arg1: i32, %arg2: memref<8x128xf32, #tpu.memory_space<vmem>>, %arg3: memref<1xf32, #tpu.memory_space<smem>>, %arg4: memref<1x128xf32, #tpu.memory_space<vmem>>, %arg5: memref<1x128xf32, #tpu.memory_space<vmem>>) attributes {dimension_semantics = [#tpu.dimension_semantics<parallel>, #tpu.dimension_semantics<arbitrary>], iteration_bounds = array<i64: 1, 1>, scalar_prefetch = 0 : i64, scratch_operands = 1 : i64, tpu.core_type = #tpu.core_type<tc>, window_params = [{transform_indices = @transform_0, window_bounds = array<i64: 8, 128>}, {transform_indices = @transform_1, window_bounds = array<i64: 1>}, {transform_indices = @transform_2, window_bounds = array<i64: 1, 128>}]} {
    %c0_i32 = arith.constant 0 : i32
    %0 = arith.cmpi eq, %arg1, %c0_i32 : i32
    %1 = arith.extui %0 : i1 to i32
    %c0_i32_0 = arith.constant 0 : i32
    %2 = arith.cmpi ne, %1, %c0_i32_0 : i32
    scf.if %2 {
      %cst_10 = arith.constant 0.000000e+00 : f32
      %17 = vector.broadcast %cst_10 : f32 to vector<1x128xf32>
      %c0_11 = arith.constant 0 : index
      %c0_12 = arith.constant 0 : index
      %18 = vector.load %arg5[%c0_11, %c0_12] : memref<1x128xf32, #tpu.memory_space<vmem>>, vector<1x128xf32>
      tpu.vector_store %arg5[%c0_11, %c0_12], %17 {strides = array<i32>} : memref<1x128xf32, #tpu.memory_space<vmem>>, vector<1x128xf32>,
    } else {
    }
    %c0 = arith.constant 0 : index
    %c0_1 = arith.constant 0 : index
    %3 = vector.load %arg2[%c0, %c0_1] : memref<8x128xf32, #tpu.memory_space<vmem>>, vector<8x128xf32>
    %cst = arith.constant 0.000000e+00 : f32
    %4 = vector.broadcast %cst : f32 to vector<8x128xf32>
    %5 = arith.cmpf oge, %3, %4 : vector<8x128xf32>
    %cst_2 = arith.constant 0.00999999977 : f32
    %6 = vector.broadcast %cst_2 : f32 to vector<8x128xf32>
    %7 = arith.mulf %6, %3 : vector<8x128xf32>
    %8 = arith.select %5, %3, %7 : vector<8x128xi1>, vector<8x128xf32>
    %c0_3 = arith.constant 0 : index
    %c0_4 = arith.constant 0 : index
    %9 = vector.load %arg5[%c0_3, %c0_4] : memref<1x128xf32, #tpu.memory_space<vmem>>, vector<1x128xf32>
    %cst_5 = arith.constant dense<0.000000e+00> : vector<128xf32>
    %10 = vector.multi_reduction <add>, %8, %cst_5 [0] : vector<8x128xf32> to vector<128xf32>
    %11 = vector.shape_cast %10 : vector<128xf32> to vector<1x128xf32>
    %12 = arith.addf %9, %11 : vector<1x128xf32>
    %c0_6 = arith.constant 0 : index
    %c0_7 = arith.constant 0 : index
    %13 = vector.load %arg5[%c0_6, %c0_7] : memref<1x128xf32, #tpu.memory_space<vmem>>, vector<1x128xf32>
    tpu.vector_store %arg5[%c0_6, %c0_7], %12 {strides = array<i32>} : memref<1x128xf32, #tpu.memory_space<vmem>>, vector<1x128xf32>,
    %c0_i32_8 = arith.constant 0 : i32
    %14 = arith.cmpi eq, %arg1, %c0_i32_8 : i32
    %15 = arith.extui %14 : i1 to i32
    %c0_i32_9 = arith.constant 0 : i32
    %16 = arith.cmpi ne, %15, %c0_i32_9 : i32
    scf.if %16 {
      %c0_10 = arith.constant 0 : index
      %c0_11 = arith.constant 0 : index
      %17 = vector.load %arg5[%c0_10, %c0_11] : memref<1x128xf32, #tpu.memory_space<vmem>>, vector<1x128xf32>
      %c0_12 = arith.constant 0 : index
      %18 = memref.load %arg3[%c0_12] : memref<1xf32, #tpu.memory_space<smem>>
      %19 = vector.broadcast %18 : f32 to vector<1x128xf32>
      %20 = arith.addf %17, %19 : vector<1x128xf32>
      %21 = arith.negf %20 : vector<1x128xf32>
      %22 = math.exp %21 : vector<1x128xf32>
      %cst_13 = arith.constant 1.000000e+00 : f32
      %23 = vector.broadcast %cst_13 : f32 to vector<1x128xf32>
      %24 = arith.addf %23, %22 : vector<1x128xf32>
      %25 = arith.divf %23, %24 : vector<1x128xf32>
      %c0_14 = arith.constant 0 : index
      %c0_15 = arith.constant 0 : index
      %26 = vector.load %arg4[%c0_14, %c0_15] : memref<1x128xf32, #tpu.memory_space<vmem>>, vector<1x128xf32>
      tpu.vector_store %arg4[%c0_14, %c0_15], %25 {strides = array<i32>} : memref<1x128xf32, #tpu.memory_space<vmem>>, vector<1x128xf32>,
    } else {
    }
    return
  }
  func.func @transform_0(%arg0: i32, %arg1: i32) -> (i32, i32) {
    %c0_i32 = arith.constant 0 : i32
    return %arg1, %arg0 : i32, i32
  }
  func.func @transform_1(%arg0: i32, %arg1: i32) -> i32 {
    %c0_i32 = arith.constant 0 : i32
    %c0_i32_0 = arith.constant 0 : i32
    return %c0_i32 : i32
  }
  func.func @transform_2(%arg0: i32, %arg1: i32) -> (i32, i32) {
    %c0_i32 = arith.constant 0 : i32
    %c0_i32_0 = arith.constant 0 : i32
    return %c0_i32, %arg0 : i32, i32
  }
}

</mosaic_0001>

<llo_original>
// kernel: pathl_forward.1
$region0: #{pathl_forward.1}
  #allocation0 [shape = 'u32[]', space=smem, size = 0x4, offset = 0x4, fixed_abs, tag = 'smem constant byte address 0x4 - core index']
  #allocation1 [shape = 'u32[144,128]{1,0:T(1,128)}', space=vmem, size = 0x12000, scoped, tag = 'internal scratch']
  #allocation2 [shape = 'f32[1,128]{1,0:T(1,128)}', space=vmem, size = 0x200, scoped, tag = 'scratch operand']
  #allocation3 [shape = 'f32[1]{0:T(128)S(6)}', space=smem, size = 0x200, scoped, tag = 'scoped memory for pathl_forward.1']
  %s0 = inlined_call_operand.vmem [shape: f32[8,128], index: 0, kind: input, shape index: {}]
  %s1 = inlined_call_operand.<no memory space> [shape: f32[1], index: 1, kind: input, shape index: {}]
  %s2 = inlined_call_operand.vmem [shape: f32[1,128], index: 2, kind: output, shape index: {}]
  %s3 = sld [smem:[#allocation0]]
  $region26: #{pathl_forward.1} parent=0
    _
  %s5 = ssub.s32 1, %s3
  %s6 = scalar_select 0, %s5, %s3
  %7 = sst [smem:[#allocation3]] %s1
  // Predicated region
  $region2: #{pathl_forward.1} parent=0 // pred_check
    _
  $region3: #{pathl_forward.1} parent=0 // pred_check_branch
    %9 = sbr.rel (0) target = $region5
  $region4: #{pathl_forward.1} parent=0 // pred_region
    _
  $region5: #{pathl_forward.1} parent=0 // pred_fallthru
    _
  // Predicated region
  $region6: #{pathl_forward.1} parent=0 // pred_check
    _
  $region7: #{pathl_forward.1} parent=0 // pred_check_branch
    %11 = sbr.rel (0) target = $region9
  $region8: #{pathl_forward.1} parent=0 // pred_region
    _
  $region9: #{pathl_forward.1} parent=0 // pred_fallthru
    _
  %p12 = scmp.eq.s32.totalorder 0, 0
  // Predicated region
  $region10: #{pathl_forward.1} parent=0 // pred_check
    %p13 = pneg %p12
  $region11: #{pathl_forward.1} parent=0 // pred_check_branch
    %15 = sbr.rel (%p13) target = $region13
  $region12: #{pathl_forward.1} parent=0 // pred_region
    %16 = vst [vmem:[#allocation2] sm:$0x1] 0.0
  $region13: #{pathl_forward.1} parent=0 // pred_fallthru
    _
  %v17 = vld [vmem:[%s0] sm:$0xff]
  %vm18 = vcmp.ge.f32.partialorder %v17, 0.0
  %v19 = vmul.f32 %v17, 0.01
  %v20 = vsel %vm18, %v17, %v19
  %v21 = vld [vmem:[#allocation2] sm:$0x1]
  %v22 = vrot.slane %v20, 4
  %v23 = vadd.f32 %v20, %v22
  %v24 = vrot.slane %v23, 2
  %v25 = vadd.f32 %v23, %v24
  %v26 = vrot.slane %v25, 1
  %v27 = vadd.f32 %v25, %v26
  %v28 = vadd.f32 %v21, %v27
  %29 = vst [vmem:[#allocation2] sm:$0x1] %v28
  // Predicated region
  $region14: #{pathl_forward.1} parent=0 // pred_check
    %p30 = pneg %p12
  $region15: #{pathl_forward.1} parent=0 // pred_check_branch
    %32 = sbr.rel (%p30) target = $region17
  $region16: #{pathl_forward.1} parent=0 // pred_region
    %v33 = vld [vmem:[#allocation2] sm:$0x1]
    %s34 = sld [smem:[#allocation3]]
    %v35 = vstv %s34
    %v36 = vadd.f32 %v33, %v35
    %v37 = vxor.u32 %v36, 2147483648
    %v38 = vmul.f32 %v37, 1.442695
    %v39 = vpow.pop %v38
    %v40 = vadd.f32 %v39, 1.0
    %v41 = vrcp.pop %v40
    %v42 = vmul.f32 1.0, %v41
    %43 = vst [vmem:[%s2] sm:$0x1] %v42
  $region17: #{pathl_forward.1} parent=0 // pred_fallthru
    _
  // Predicated region
  $region18: #{pathl_forward.1} parent=0 // pred_check
    _
  $region19: #{pathl_forward.1} parent=0 // pred_check_branch
    %45 = sbr.rel (0) target = $region21
  $region20: #{pathl_forward.1} parent=0 // pred_region
    _
  $region21: #{pathl_forward.1} parent=0 // pred_fallthru
    _
  // Predicated region
  $region22: #{pathl_forward.1} parent=0 // pred_check
    _
  $region23: #{pathl_forward.1} parent=0 // pred_check_branch
    %47 = sbr.rel (0) target = $region25
  $region24: #{pathl_forward.1} parent=0 // pred_region
    _
  $region25: #{pathl_forward.1} parent=0 // pred_fallthru
    _

</llo_original>
